<compile_context>
chip_gen: v6e
topology: v6e:2x2x1
jax: 0.10.0
libtpu: 0.0.40
codegen_flags: <defaults>
</compile_context>

<pallas_src>
import functools

import jax
import jax.numpy as jnp
import numpy as np
from jax.experimental import pallas as pl
from jax.experimental.pallas import tpu as pltpu


def _round_up(x, m):
    return ((x + m - 1) // m) * m


# ----------------------------- Pallas kernel ------------------------------- #
def _wta_cnp_kernel(
    obs_ref, tar_ref,              # data, flattened over batch
    enc_ref,                       # packed encoder slab        (rows, H_enc)
    dec1_ref,                      # packed decoder-1 + gate    (rows, DH + D)
    dec2_ref,                      # packed block-diag decoder-2 (DH + 1, D*2*d_out)
    pred_ref, gate_ref,            # outputs
    *,
    n_obs, d_xy, d_x, H_enc, DH, D,
    we2_off, we3_off, ebias_off, tar_off, dbias_off,
):
    f32 = jnp.float32
    BB, n_t, d2o_total = pred_ref.shape

    obs = obs_ref[...]                                         # (BB*n_obs, d_xy)

    # ---- encoder layer 1: K = d_xy (tiny) -> VPU broadcast multiplies ----- #
    h = obs[:, 0:1] * enc_ref[0:1, :]
    for c in range(1, d_xy):
        h = h + obs[:, c:c + 1] * enc_ref[c:c + 1, :]
    h = h + enc_ref[ebias_off:ebias_off + 1, :]
    h = jnp.maximum(h, 0.0)

    # ---- encoder layers 2 / 3 (MXU) ---------------------------------------- #
    h = jnp.dot(h, enc_ref[we2_off:we2_off + H_enc, :],
                preferred_element_type=f32) + enc_ref[ebias_off + 1:ebias_off + 2, :]
    h = jnp.maximum(h, 0.0)
    h = jnp.dot(h, enc_ref[we3_off:we3_off + H_enc, :],
                preferred_element_type=f32) + enc_ref[ebias_off + 2:ebias_off + 3, :]

    # ---- per-batch mean over observations (PyTorch: mean(dim=1)) ----------- #
    rep = jnp.mean(h.reshape(BB, n_obs, H_enc), axis=1)        # (BB, H_enc)

    # ---- fused (decoder-1 rep part | gate) matmul: ONE MXU call ------------- #
    #   columns [0 : DH]      -> rep @ Wd1_rep_cat + bd1_cat (bias folded in)
    #   columns [DH : DH+D]   -> rep @ Wg + bg               (gate logits)
    rep_out = jnp.dot(rep, dec1_ref[0:H_enc, :], preferred_element_type=f32) \
        + dec1_ref[dbias_off:dbias_off + 1, :]                 # (BB, DH + D)

    logits = rep_out[:, DH:DH + D]
    e = jnp.exp(logits - jnp.max(logits, axis=-1, keepdims=True))
    # exact reciprocal: keeps the 1e-5 check against the pure-JAX reference tight
    gate = e * pl.reciprocal(jnp.sum(e, axis=-1, keepdims=True), approx=False)
    gate_ref[...] = gate.reshape(gate_ref.shape)               # (BB, 1, D)

    rep_part = rep_out[:, 0:DH]                                # bd1 already added

    # ---- tar contribution: K = d_x ------------------------------------------ #
    tar = tar_ref[...]                                         # (BB*n_t, d_x)
    if d_x == 1:
        # K=1 contraction -> VPU broadcast outer product (skip the MXU).
        tar_part = tar * dec1_ref[tar_off:tar_off + 1, 0:DH]
    else:
        tar_part = jnp.dot(tar, dec1_ref[tar_off:tar_off + d_x, 0:DH],
                           preferred_element_type=f32)

    d1 = rep_part[:, None, :] + tar_part.reshape(BB, n_t, DH)  # (BB, n_t, DH)
    d1 = jnp.maximum(d1, 0.0).reshape(BB * n_t, DH)

    # ---- block-diagonal decoder layer 2: one wide matmul + one wide store --- #
    out = jnp.dot(d1, dec2_ref[0:DH, :], preferred_element_type=f32) \
        + dec2_ref[DH:DH + 1, :]
    pred_ref[...] = out.reshape(BB, n_t, d2o_total)


# --------------------- one-time weight packing (init-time) ------------------ #
def pack_wta_cnp_params(params, *, num_decoders, output_dim):
    """Pack weights into 3 lane-dense slabs.  Called ONCE, not per forward."""
    D = num_decoders
    d2o = 2 * output_dim
    d_xy = params["we1"].shape[0]
    H_enc = params["we3"].shape[1]
    d_x = params["wd1_tar"].shape[1]
    H_dec = params["wd1_rep"].shape[2]
    DH = D * H_dec
    # Single-slab encoder packing assumes equal encoder hidden widths
    # (the module's default [256,256,256]-style configuration).
    assert params["we1"].shape[1] == params["we2"].shape[1] == H_enc

    # encoder slab: [we1 | pad][we2][we3][be1; be2; be3 | pad], lane width H_enc
    we2_off = _round_up(d_xy, 8)
    we3_off = we2_off + H_enc
    ebias_off = _round_up(we3_off + H_enc, 8)
    enc_rows = _round_up(ebias_off + 3, 8)
    enc = jnp.zeros((enc_rows, H_enc), jnp.float32)
    enc = enc.at[0:d_xy, :].set(params["we1"])
    enc = enc.at[we2_off:we2_off + H_enc, :].set(params["we2"])
    enc = enc.at[we3_off:we3_off + H_enc, :].set(params["we3"])
    enc = enc.at[ebias_off, :].set(params["be1"][0])
    enc = enc.at[ebias_off + 1, :].set(params["be2"][0])
    enc = enc.at[ebias_off + 2, :].set(params["be3"][0])

    # decoder-1 + gate slab (lane width DH + D):
    #   rows [0 : H_enc]          -> [Wd1_rep_cat | Wg]
    #   rows [H_enc : H_enc+d_x]  -> [Wd1_tar_cat | 0 ]
    #   row  [H_enc + d_x]        -> [bd1_cat     | bg]
    tar_off = H_enc
    dbias_off = H_enc + d_x
    dec1 = jnp.zeros((dbias_off + 1, DH + D), jnp.float32)
    wd1_rep_cat = jnp.transpose(params["wd1_rep"], (1, 0, 2)).reshape(H_enc, DH)
    wd1_tar_cat = jnp.transpose(params["wd1_tar"], (1, 0, 2)).reshape(d_x, DH)
    dec1 = dec1.at[0:H_enc, 0:DH].set(wd1_rep_cat)
    dec1 = dec1.at[0:H_enc, DH:DH + D].set(params["wg"])
    dec1 = dec1.at[tar_off:tar_off + d_x, 0:DH].set(wd1_tar_cat)
    dec1 = dec1.at[dbias_off, 0:DH].set(params["bd1"].reshape(DH))
    dec1 = dec1.at[dbias_off, DH:DH + D].set(params["bg"][0])

    # decoder-2 slab: block-diagonal weights (exact f32 zero padding) + bias row
    eye = jnp.eye(D, dtype=jnp.float32)
    wd2_blk = (eye[:, None, :, None] * params["wd2"][:, :, None, :]
               ).reshape(DH, D * d2o)
    dec2 = jnp.concatenate([wd2_blk, params["bd2"].reshape(1, D * d2o)], axis=0)

    layout = dict(D=D, d2o=d2o, d_xy=d_xy, d_x=d_x, H_enc=H_enc, DH=DH,
                  we2_off=we2_off, we3_off=we3_off, ebias_off=ebias_off,
                  tar_off=tar_off, dbias_off=dbias_off)
    return dict(enc=enc, dec1=dec1, dec2=dec2, layout=layout)


# ------------------------------ forward wrapper ----------------------------- #
def wta_cnp_forward(obs, tar, packed, *, num_programs=None):
    B, n_obs, d_xy = obs.shape
    _, n_t, d_x = tar.shape
    lay = packed["layout"]
    D, d2o, H_enc, DH = lay["D"], lay["d2o"], lay["H_enc"], lay["DH"]
    assert d_xy == lay["d_xy"] and d_x == lay["d_x"]

    # Default to a single grid step: v5e/v6e have one TensorCore, and on v7x a
    # 2-way split only pays off once each core gets a non-trivial slab of rows.
    if num_programs is None:
        num_programs = 2 if (B % 2 == 0 and B * max(n_obs, n_t) >= 256) else 1
    assert B % num_programs == 0
    BB = B // num_programs

    obs_flat = obs.reshape(B * n_obs, d_xy).astype(jnp.float32)
    tar_flat = tar.reshape(B * n_t, d_x).astype(jnp.float32)
    enc, dec1, dec2 = packed["enc"], packed["dec1"], packed["dec2"]

    kernel = functools.partial(
        _wta_cnp_kernel,
        n_obs=n_obs, d_xy=d_xy, d_x=d_x, H_enc=H_enc, DH=DH, D=D,
        we2_off=lay["we2_off"], we3_off=lay["we3_off"],
        ebias_off=lay["ebias_off"], tar_off=lay["tar_off"],
        dbias_off=lay["dbias_off"])

    in_specs = [
        pl.BlockSpec((BB * n_obs, d_xy), lambda g: (g, 0)),    # obs (flattened)
        pl.BlockSpec((BB * n_t, d_x), lambda g: (g, 0)),       # tar (flattened)
        pl.BlockSpec(enc.shape, lambda g: (0, 0)),             # encoder slab
        pl.BlockSpec(dec1.shape, lambda g: (0, 0)),            # decoder-1 + gate slab
        pl.BlockSpec(dec2.shape, lambda g: (0, 0)),            # decoder-2 slab
    ]
    out_shape = (
        jax.ShapeDtypeStruct((B, n_t, D * d2o), jnp.float32),  # packed, lane-dense pred
        jax.ShapeDtypeStruct((B, 1, D), jnp.float32),          # gate
    )
    out_specs = (
        pl.BlockSpec((BB, n_t, D * d2o), lambda g: (g, 0, 0)),
        pl.BlockSpec((BB, 1, D), lambda g: (g, 0, 0)),
    )

    pred_packed, gate_vals = pl.pallas_call(
        kernel,
        grid=(num_programs,),
        in_specs=in_specs,
        out_specs=out_specs,
        out_shape=out_shape,
        compiler_params=pltpu.CompilerParams(
            dimension_semantics=("parallel",)),
    )(obs_flat, tar_flat, enc, dec1, dec2)

    # Un-permute to the PyTorch output layout (num_decoders, B, n_t, 2*d_out).
    # Pure layout plumbing; skip it if the consumer can take the packed layout.
    pred = jnp.transpose(pred_packed.reshape(B, n_t, D, d2o), (2, 0, 1, 3))
    return pred, gate_vals


# --------------------------- pure-JAX reference ----------------------------- #
def ref_forward(obs, tar, params, *, num_decoders):
    h = jax.nn.relu(obs @ params["we1"] + params["be1"])
    h = jax.nn.relu(h @ params["we2"] + params["be2"])
    h = h @ params["we3"] + params["be3"]
    rep = h.mean(axis=1, keepdims=True)                        # (B, 1, H)
    gate = jax.nn.softmax(rep @ params["wg"] + params["bg"], axis=-1)
    rep_rep = jnp.repeat(rep, tar.shape[1], axis=1)
    rep_tar = jnp.concatenate([rep_rep, tar], axis=-1)
    wd1 = jnp.concatenate([params["wd1_rep"], params["wd1_tar"]], axis=1)
    preds = []
    for i in range(num_decoders):
        d = jax.nn.relu(rep_tar @ wd1[i] + params["bd1"][i])
        preds.append(d @ params["wd2"][i] + params["bd2"][i])
    return jnp.stack(preds, axis=0), gate


# ----------------------------------- main ----------------------------------- #
if __name__ == "__main__":
    # Small but consistent with the module's forward().
    input_dim, output_dim = 1, 1
    enc_hidden = [64, 64, 64]
    dec_hidden = [32, 32]     # NOTE: original PyTorch code only uses dec_hidden[0]
    num_decoders = 4
    B, n_obs, n_t = 4, 8, 8

    H_enc = enc_hidden[-1]
    H_dec = dec_hidden[0]
    d_xy = input_dim + output_dim

    key = jax.random.PRNGKey(0)
    ks = jax.random.split(key, 20)

    def init(k, shape, scale=0.1):
        return (scale * jax.random.normal(k, shape)).astype(jnp.float32)

    # Decoder layer-1 weight (H_enc + input_dim, H_dec) stored split into the
    # rep part (H_enc, H_dec) and tar part (input_dim, H_dec).
    params = {
        "we1": init(ks[0], (d_xy, enc_hidden[0])),
        "be1": init(ks[1], (1, enc_hidden[0])),
        "we2": init(ks[2], (enc_hidden[0], enc_hidden[1])),
        "be2": init(ks[3], (1, enc_hidden[1])),
        "we3": init(ks[4], (enc_hidden[1], enc_hidden[2])),
        "be3": init(ks[5], (1, enc_hidden[2])),
        "wg": init(ks[6], (H_enc, num_decoders)),
        "bg": init(ks[7], (1, num_decoders)),
        "wd1_rep": init(ks[8], (num_decoders, H_enc, H_dec)),
        "wd1_tar": init(ks[9], (num_decoders, input_dim, H_dec)),
        "bd1": init(ks[10], (num_decoders, 1, H_dec)),
        "wd2": init(ks[11], (num_decoders, H_dec, 2 * output_dim)),
        "bd2": init(ks[12], (num_decoders, 1, 2 * output_dim)),
    }
    # TODO(synk): the PyTorch __init__ reuses the same Linear objects across all
    # decoders (tied weights); here each decoder gets independent weights.

    obs = jax.random.normal(ks[13], (B, n_obs, d_xy), dtype=jnp.float32)
    tar = jax.random.normal(ks[14], (B, n_t, input_dim), dtype=jnp.float32)

    # One-time packing (hoisted out of the forward path).
    packed = pack_wta_cnp_params(params, num_decoders=num_decoders,
                                 output_dim=output_dim)
    packed = jax.block_until_ready(packed)

    pred, gate_vals = wta_cnp_forward(obs, tar, packed)
    pred = jax.block_until_ready(pred)
    gate_vals = jax.block_until_ready(gate_vals)

    pred_ref, gate_ref = ref_forward(obs, tar, params, num_decoders=num_decoders)

    np.testing.assert_allclose(np.asarray(pred), np.asarray(pred_ref),
                               rtol=1e-5, atol=1e-5)
    np.testing.assert_allclose(np.asarray(gate_vals), np.asarray(gate_ref),
                               rtol=1e-5, atol=1e-5)
    assert pred.shape == (num_decoders, B, n_t, 2 * output_dim)
    assert gate_vals.shape == (B, 1, num_decoders)

    print("KERNEL_OK")
</pallas_src>

<mosaic_0001>
module attributes {stable_mosaic.version = 11 : i64} {
  func.func @_wta_cnp_kernel(%arg0: i32, %arg1: memref<32x2xf32, #tpu.memory_space<vmem>>, %arg2: memref<32x1xf32, #tpu.memory_space<vmem>>, %arg3: memref<144x64xf32, #tpu.memory_space<vmem>>, %arg4: memref<66x132xf32, #tpu.memory_space<vmem>>, %arg5: memref<129x8xf32, #tpu.memory_space<vmem>>, %arg6: memref<4x8x8xf32, #tpu.memory_space<vmem>>, %arg7: memref<4x1x4xf32, #tpu.memory_space<vmem>>) attributes {dimension_semantics = [#tpu.dimension_semantics<parallel>], iteration_bounds = array<i64: 1>, scalar_prefetch = 0 : i64, scratch_operands = 0 : i64, tpu.core_type = #tpu.core_type<tc>, window_params = [{transform_indices = @transform_0, window_bounds = array<i64: 32, 2>}, {transform_indices = @transform_1, window_bounds = array<i64: 32, 1>}, {pipeline_mode = #tpu.pipeline_mode<synchronous>, transform_indices = @transform_2, window_bounds = array<i64: 144, 64>}, {pipeline_mode = #tpu.pipeline_mode<synchronous>, transform_indices = @transform_3, window_bounds = array<i64: 66, 132>}, {pipeline_mode = #tpu.pipeline_mode<synchronous>, transform_indices = @transform_4, window_bounds = array<i64: 129, 8>}, {transform_indices = @transform_5, window_bounds = array<i64: 4, 8, 8>}, {transform_indices = @transform_6, window_bounds = array<i64: 4, 1, 4>}]} {
    %c0 = arith.constant 0 : index
    %c0_0 = arith.constant 0 : index
    %0 = vector.load %arg1[%c0, %c0_0] : memref<32x2xf32, #tpu.memory_space<vmem>>, vector<32x2xf32>
    %1 = vector.extract_strided_slice %0 {offsets = [0, 0], sizes = [32, 1], strides = [1, 1]} : vector<32x2xf32> to vector<32x1xf32>
    %c0_1 = arith.constant 0 : index
    %c0_2 = arith.constant 0 : index
    %2 = vector.load %arg3[%c0_1, %c0_2] : memref<144x64xf32, #tpu.memory_space<vmem>>, vector<1x64xf32>
    %3 = vector.broadcast %1 : vector<32x1xf32> to vector<32x64xf32>
    %4 = vector.broadcast %2 : vector<1x64xf32> to vector<32x64xf32>
    %5 = arith.mulf %3, %4 : vector<32x64xf32>
    %6 = vector.extract_strided_slice %0 {offsets = [0, 1], sizes = [32, 1], strides = [1, 1]} : vector<32x2xf32> to vector<32x1xf32>
    %c1 = arith.constant 1 : index
    %c0_3 = arith.constant 0 : index
    %7 = vector.load %arg3[%c1, %c0_3] : memref<144x64xf32, #tpu.memory_space<vmem>>, vector<1x64xf32>
    %8 = vector.broadcast %6 : vector<32x1xf32> to vector<32x64xf32>
    %9 = vector.broadcast %7 : vector<1x64xf32> to vector<32x64xf32>
    %10 = arith.mulf %8, %9 : vector<32x64xf32>
    %11 = arith.addf %5, %10 : vector<32x64xf32>
    %c136 = arith.constant 136 : index
    %c0_4 = arith.constant 0 : index
    %12 = vector.load %arg3[%c136, %c0_4] : memref<144x64xf32, #tpu.memory_space<vmem>>, vector<1x64xf32>
    %13 = vector.broadcast %12 : vector<1x64xf32> to vector<32x64xf32>
    %14 = arith.addf %11, %13 : vector<32x64xf32>
    %cst = arith.constant 0.000000e+00 : f32
    %15 = vector.broadcast %cst : f32 to vector<32x64xf32>
    %16 = arith.maximumf %14, %15 : vector<32x64xf32>
    %c8 = arith.constant 8 : index
    %c0_5 = arith.constant 0 : index
    %17 = vector.load %arg3[%c8, %c0_5] : memref<144x64xf32, #tpu.memory_space<vmem>>, vector<64x64xf32>
    %cst_6 = arith.constant dense<0.000000e+00> : vector<32x64xf32>
    %18 = tpu.matmul %16, %17, %cst_6 {dimension_numbers = #tpu.dot_dimension_numbers<[1], [0], [0], [1], [0, 0, 1, 1], [], []>} : vector<32x64xf32>, vector<64x64xf32>, vector<32x64xf32> -> vector<32x64xf32>
    %c137 = arith.constant 137 : index
    %c0_7 = arith.constant 0 : index
    %19 = vector.load %arg3[%c137, %c0_7] : memref<144x64xf32, #tpu.memory_space<vmem>>, vector<1x64xf32>
    %20 = vector.broadcast %19 : vector<1x64xf32> to vector<32x64xf32>
    %21 = arith.addf %18, %20 : vector<32x64xf32>
    %cst_8 = arith.constant 0.000000e+00 : f32
    %22 = vector.broadcast %cst_8 : f32 to vector<32x64xf32>
    %23 = arith.maximumf %21, %22 : vector<32x64xf32>
    %c72 = arith.constant 72 : index
    %c0_9 = arith.constant 0 : index
    %24 = vector.load %arg3[%c72, %c0_9] : memref<144x64xf32, #tpu.memory_space<vmem>>, vector<64x64xf32>
    %cst_10 = arith.constant dense<0.000000e+00> : vector<32x64xf32>
    %25 = tpu.matmul %23, %24, %cst_10 {dimension_numbers = #tpu.dot_dimension_numbers<[1], [0], [0], [1], [0, 0, 1, 1], [], []>} : vector<32x64xf32>, vector<64x64xf32>, vector<32x64xf32> -> vector<32x64xf32>
    %c138 = arith.constant 138 : index
    %c0_11 = arith.constant 0 : index
    %26 = vector.load %arg3[%c138, %c0_11] : memref<144x64xf32, #tpu.memory_space<vmem>>, vector<1x64xf32>
    %27 = vector.broadcast %26 : vector<1x64xf32> to vector<32x64xf32>
    %28 = arith.addf %25, %27 : vector<32x64xf32>
    %29 = vector.shape_cast %28 : vector<32x64xf32> to vector<4x8x64xf32>
    %cst_12 = arith.constant dense<0.000000e+00> : vector<4x64xf32>
    %30 = vector.multi_reduction <add>, %29, %cst_12 [1] : vector<4x8x64xf32> to vector<4x64xf32>
    %cst_13 = arith.constant 8.000000e+00 : f32
    %31 = vector.broadcast %cst_13 : f32 to vector<4x64xf32>
    %32 = arith.divf %30, %31 : vector<4x64xf32>
    %c0_14 = arith.constant 0 : index
    %c0_15 = arith.constant 0 : index
    %33 = vector.load %arg4[%c0_14, %c0_15] : memref<66x132xf32, #tpu.memory_space<vmem>>, vector<64x132xf32>
    %cst_16 = arith.constant dense<0.000000e+00> : vector<4x132xf32>
    %34 = tpu.matmul %32, %33, %cst_16 {dimension_numbers = #tpu.dot_dimension_numbers<[1], [0], [0], [1], [0, 0, 1, 1], [], []>} : vector<4x64xf32>, vector<64x132xf32>, vector<4x132xf32> -> vector<4x132xf32>
    %c65 = arith.constant 65 : index
    %c0_17 = arith.constant 0 : index
    %35 = vector.load %arg4[%c65, %c0_17] : memref<66x132xf32, #tpu.memory_space<vmem>>, vector<1x132xf32>
    %36 = vector.broadcast %35 : vector<1x132xf32> to vector<4x132xf32>
    %37 = arith.addf %34, %36 : vector<4x132xf32>
    %38 = vector.extract_strided_slice %37 {offsets = [0, 128], sizes = [4, 4], strides = [1, 1]} : vector<4x132xf32> to vector<4x4xf32>
    %cst_18 = arith.constant dense<0xFF800000> : vector<4xf32>
    %39 = vector.multi_reduction <maximumf>, %38, %cst_18 [1] : vector<4x4xf32> to vector<4xf32>
    %40 = vector.shape_cast %39 : vector<4xf32> to vector<4x1xf32>
    %41 = vector.broadcast %40 : vector<4x1xf32> to vector<4x4xf32>
    %42 = arith.subf %38, %41 : vector<4x4xf32>
    %43 = math.exp %42 : vector<4x4xf32>
    %cst_19 = arith.constant dense<0.000000e+00> : vector<4xf32>
    %44 = vector.multi_reduction <add>, %43, %cst_19 [1] : vector<4x4xf32> to vector<4xf32>
    %45 = vector.shape_cast %44 : vector<4xf32> to vector<4x1xf32>
    %46 = tpu.reciprocal %45 : vector<4x1xf32> -> vector<4x1xf32>
    %47 = vector.broadcast %46 : vector<4x1xf32> to vector<4x4xf32>
    %48 = arith.mulf %43, %47 : vector<4x4xf32>
    %49 = vector.shape_cast %48 : vector<4x4xf32> to vector<4x1x4xf32>
    %c0_20 = arith.constant 0 : index
    %c0_21 = arith.constant 0 : index
    %c0_22 = arith.constant 0 : index
    %50 = vector.load %arg7[%c0_20, %c0_21, %c0_22] : memref<4x1x4xf32, #tpu.memory_space<vmem>>, vector<4x1x4xf32>
    tpu.vector_store %arg7[%c0_20, %c0_21, %c0_22], %49 {strides = array<i32>} : memref<4x1x4xf32, #tpu.memory_space<vmem>>, vector<4x1x4xf32>,
    %51 = vector.extract_strided_slice %37 {offsets = [0, 0], sizes = [4, 128], strides = [1, 1]} : vector<4x132xf32> to vector<4x128xf32>
    %c0_23 = arith.constant 0 : index
    %c0_24 = arith.constant 0 : index
    %52 = vector.load %arg2[%c0_23, %c0_24] : memref<32x1xf32, #tpu.memory_space<vmem>>, vector<32x1xf32>
    %c64 = arith.constant 64 : index
    %c0_25 = arith.constant 0 : index
    %53 = vector.load %arg4[%c64, %c0_25] : memref<66x132xf32, #tpu.memory_space<vmem>>, vector<1x128xf32>
    %54 = vector.broadcast %52 : vector<32x1xf32> to vector<32x128xf32>
    %55 = vector.broadcast %53 : vector<1x128xf32> to vector<32x128xf32>
    %56 = arith.mulf %54, %55 : vector<32x128xf32>
    %57 = vector.shape_cast %51 : vector<4x128xf32> to vector<4x1x128xf32>
    %58 = vector.shape_cast %56 : vector<32x128xf32> to vector<4x8x128xf32>
    %59 = vector.broadcast %57 : vector<4x1x128xf32> to vector<4x8x128xf32>
    %60 = arith.addf %59, %58 : vector<4x8x128xf32>
    %cst_26 = arith.constant 0.000000e+00 : f32
    %61 = vector.broadcast %cst_26 : f32 to vector<4x8x128xf32>
    %62 = arith.maximumf %60, %61 : vector<4x8x128xf32>
    %63 = vector.shape_cast %62 : vector<4x8x128xf32> to vector<32x128xf32>
    %c0_27 = arith.constant 0 : index
    %c0_28 = arith.constant 0 : index
    %64 = vector.load %arg5[%c0_27, %c0_28] : memref<129x8xf32, #tpu.memory_space<vmem>>, vector<128x8xf32>
    %cst_29 = arith.constant dense<0.000000e+00> : vector<32x8xf32>
    %65 = tpu.matmul %63, %64, %cst_29 {dimension_numbers = #tpu.dot_dimension_numbers<[1], [0], [0], [1], [0, 0, 1, 1], [], []>} : vector<32x128xf32>, vector<128x8xf32>, vector<32x8xf32> -> vector<32x8xf32>
    %c128 = arith.constant 128 : index
    %c0_30 = arith.constant 0 : index
    %66 = vector.load %arg5[%c128, %c0_30] : memref<129x8xf32, #tpu.memory_space<vmem>>, vector<1x8xf32>
    %67 = vector.broadcast %66 : vector<1x8xf32> to vector<32x8xf32>
    %68 = arith.addf %65, %67 : vector<32x8xf32>
    %69 = vector.shape_cast %68 : vector<32x8xf32> to vector<4x8x8xf32>
    %c0_31 = arith.constant 0 : index
    %c0_32 = arith.constant 0 : index
    %c0_33 = arith.constant 0 : index
    %70 = vector.load %arg6[%c0_31, %c0_32, %c0_33] : memref<4x8x8xf32, #tpu.memory_space<vmem>>, vector<4x8x8xf32>
    tpu.vector_store %arg6[%c0_31, %c0_32, %c0_33], %69 {strides = array<i32>} : memref<4x8x8xf32, #tpu.memory_space<vmem>>, vector<4x8x8xf32>,
    return
  }
  func.func @transform_0(%arg0: i32) -> (i32, i32) {
    %c0_i32 = arith.constant 0 : i32
    %c0_i32_0 = arith.constant 0 : i32
    return %arg0, %c0_i32 : i32, i32
  }
  func.func @transform_1(%arg0: i32) -> (i32, i32) {
    %c0_i32 = arith.constant 0 : i32
    %c0_i32_0 = arith.constant 0 : i32
    return %arg0, %c0_i32 : i32, i32
  }
  func.func @transform_2(%arg0: i32) -> (i32, i32) {
    %c0_i32 = arith.constant 0 : i32
    %c0_i32_0 = arith.constant 0 : i32
    %c0_i32_1 = arith.constant 0 : i32
    return %c0_i32, %c0_i32_0 : i32, i32
  }
  func.func @transform_3(%arg0: i32) -> (i32, i32) {
    %c0_i32 = arith.constant 0 : i32
    %c0_i32_0 = arith.constant 0 : i32
    %c0_i32_1 = arith.constant 0 : i32
    return %c0_i32, %c0_i32_0 : i32, i32
  }
  func.func @transform_4(%arg0: i32) -> (i32, i32) {
    %c0_i32 = arith.constant 0 : i32
    %c0_i32_0 = arith.constant 0 : i32
    %c0_i32_1 = arith.constant 0 : i32
    return %c0_i32, %c0_i32_0 : i32, i32
  }
  func.func @transform_5(%arg0: i32) -> (i32, i32, i32) {
    %c0_i32 = arith.constant 0 : i32
    %c0_i32_0 = arith.constant 0 : i32
    %c0_i32_1 = arith.constant 0 : i32
    return %arg0, %c0_i32, %c0_i32_0 : i32, i32, i32
  }
  func.func @transform_6(%arg0: i32) -> (i32, i32, i32) {
    %c0_i32 = arith.constant 0 : i32
    %c0_i32_0 = arith.constant 0 : i32
    %c0_i32_1 = arith.constant 0 : i32
    return %arg0, %c0_i32, %c0_i32_0 : i32, i32, i32
  }
}

</mosaic_0001>

<llo_original>
// kernel: tpu_custom_call.1
$region0: #{tpu_custom_call.1}
  #allocation0 [shape = 'u32[]', space=smem, size = 0x4, offset = 0x4, fixed_abs, tag = 'smem constant byte address 0x4 - core index']
  #allocation1 [shape = 'u32[144,128]{1,0:T(1,128)}', space=vmem, size = 0x12000, scoped, tag = 'internal scratch']
  %s0 = inlined_call_operand.vmem [shape: f32[32,2], index: 0, kind: input, shape index: {}]
  %s1 = inlined_call_operand.vmem [shape: f32[32,1], index: 1, kind: input, shape index: {}]
  %s2 = inlined_call_operand.vmem [shape: f32[144,64], index: 2, kind: input, shape index: {}]
  %s3 = inlined_call_operand.vmem [shape: f32[66,132], index: 3, kind: input, shape index: {}]
  %s4 = inlined_call_operand.vmem [shape: f32[129,8], index: 4, kind: input, shape index: {}]
  %s5 = inlined_call_operand.hbm [shape: f32[4,8,8], index: 5, kind: output, shape index: {0}]
  %s6 = inlined_call_operand.hbm [shape: f32[4,1,4], index: 6, kind: output, shape index: {1}]
  %7 = xla_tuple %s5, %s6
  %s8 = sld [smem:[#allocation0]]
  $region38: #{tpu_custom_call.1} parent=0
    _
  %s10 = ssub.s32 1, %s8
  %s11 = scalar_select 0, %s10, %s8
  $region1: #{tpu_custom_call.1} parent=0
    #allocation2 [shape = 'u8[16384]{0}', space=vmem, size = 0x4000, scoped, tag = 'output window, operand 0, single buffered']
    #allocation3 [shape = 's32[1]{0}', space=sflag, size = 0x4, scoped, tag = 'scoped memory for tpu_custom_call.1']
    #allocation4 [shape = 'u8[2048]{0}', space=vmem, size = 0x800, scoped, tag = 'output window, operand 1, single buffered']
    #allocation5 [shape = 's32[1]{0}', space=sflag, size = 0x4, scoped, tag = 'scoped memory for tpu_custom_call.1']
    %12 = vsyncpa [#allocation3], 0
    %13 = vsyncpa [#allocation5], 0
    // Predicated region
    $region2: #{tpu_custom_call.1} parent=1 // pred_check
      _
    $region3: #{tpu_custom_call.1} parent=1 // pred_check_branch
      %15 = sbr.rel (0) target = $region5
    $region4: #{tpu_custom_call.1} parent=1 // pred_region
      _
    $region5: #{tpu_custom_call.1} parent=1 // pred_fallthru
      _
    // Predicated region
    $region6: #{tpu_custom_call.1} parent=1 // pred_check
      _
    $region7: #{tpu_custom_call.1} parent=1 // pred_check_branch
      %17 = sbr.rel (0) target = $region9
    $region8: #{tpu_custom_call.1} parent=1 // pred_region
      _
    $region9: #{tpu_custom_call.1} parent=1 // pred_fallthru
      _
    // Predicated region
    $region10: #{tpu_custom_call.1} parent=1 // pred_check
      _
    $region11: #{tpu_custom_call.1} parent=1 // pred_check_branch
      %19 = sbr.rel (0) target = $region13
    $region12: #{tpu_custom_call.1} parent=1 // pred_region
      _
    $region13: #{tpu_custom_call.1} parent=1 // pred_fallthru
      _
    // Predicated region
    $region14: #{tpu_custom_call.1} parent=1 // pred_check
      _
    $region15: #{tpu_custom_call.1} parent=1 // pred_check_branch
      %21 = sbr.rel (0) target = $region17
    $region16: #{tpu_custom_call.1} parent=1 // pred_region
      _
    $region17: #{tpu_custom_call.1} parent=1 // pred_fallthru
      _
    // Predicated region
    $region18: #{tpu_custom_call.1} parent=1 // pred_check
      _
    $region19: #{tpu_custom_call.1} parent=1 // pred_check_branch
      %23 = sbr.rel (0) target = $region21
    $region20: #{tpu_custom_call.1} parent=1 // pred_region
      _
    $region21: #{tpu_custom_call.1} parent=1 // pred_fallthru
      _
    %v24 = vld [vmem:[%s0] sm:$0xff]
    %v25 = vld [vmem:[%s0 + $0x8] sm:$0xff]
    %v26 = vld [vmem:[%s0 + $0x10] sm:$0xff]
    %v27 = vld [vmem:[%s0 + $0x18] sm:$0xff]
    %v28 = vld [vmem:[%s2] sm:$0x1]
    %30 = vset.pattern.permute.xlu0 0
    %31 = vperm.xlu0 %30, %v24
    %v32 = vpop.permute.xlu0 %31
    %35 = vset.pattern.permute.xlu0 0
    %36 = vperm.xlu0 %35, %v25
    %v37 = vpop.permute.xlu0 %36
    %40 = vset.pattern.permute.xlu0 0
    %41 = vperm.xlu0 %40, %v26
    %v42 = vpop.permute.xlu0 %41
    %45 = vset.pattern.permute.xlu0 0
    %46 = vperm.xlu0 %45, %v27
    %v47 = vpop.permute.xlu0 %46
    %v49 = vlaneseq
    %v50 = vshrl.u32 %v49, 7
    %v51 = vsub.s32 0, %v50
    %v52 = vrot.slane %v28, %v51
    %v53 = vmul.f32 %v32, %v52
    %v54 = vmul.f32 %v37, %v52
    %v55 = vmul.f32 %v42, %v52
    %v56 = vmul.f32 %v47, %v52
    %v57 = vld [vmem:[%s2 + $0x1] sm:$0x1]
    %58 = vset.pattern.permute.xlu0 1
    %59 = vperm.xlu0 %58, %v24
    %v60 = vpop.permute.xlu0 %59
    %62 = vset.pattern.permute.xlu0 1
    %63 = vperm.xlu0 %62, %v25
    %v64 = vpop.permute.xlu0 %63
    %66 = vset.pattern.permute.xlu0 1
    %67 = vperm.xlu0 %66, %v26
    %v68 = vpop.permute.xlu0 %67
    %70 = vset.pattern.permute.xlu0 1
    %71 = vperm.xlu0 %70, %v27
    %v72 = vpop.permute.xlu0 %71
    %v74 = vlaneseq
    %v75 = vshrl.u32 %v74, 7
    %v76 = vsub.s32 0, %v75
    %v77 = vrot.slane %v57, %v76
    %v78 = vmul.f32 %v60, %v77
    %v79 = vmul.f32 %v64, %v77
    %v80 = vmul.f32 %v68, %v77
    %v81 = vmul.f32 %v72, %v77
    %v82 = vadd.f32 %v53, %v78
    %v83 = vadd.f32 %v54, %v79
    %v84 = vadd.f32 %v55, %v80
    %v85 = vadd.f32 %v56, %v81
    %v86 = vld [vmem:[%s2 + $0x88] sm:$0x1]
    %v87 = vlaneseq
    %v88 = vshrl.u32 %v87, 7
    %v89 = vsub.s32 0, %v88
    %v90 = vrot.slane %v86, %v89
    %v91 = vadd.f32 %v82, %v90
    %v92 = vadd.f32 %v83, %v90
    %v93 = vadd.f32 %v84, %v90
    %v94 = vadd.f32 %v85, %v90
    %v95 = vmax.f32 %v91, 0.0
    %v96 = vmax.f32 %v92, 0.0
    %v97 = vmax.f32 %v93, 0.0
    %v98 = vmax.f32 %v94, 0.0
    %v99 = vld [vmem:[%s2 + $0x8] sm:$0xff]
    %v100 = vld [vmem:[%s2 + $0x10] sm:$0xff]
    %v101 = vld [vmem:[%s2 + $0x18] sm:$0xff]
    %v102 = vld [vmem:[%s2 + $0x20] sm:$0xff]
    %v103 = vld [vmem:[%s2 + $0x28] sm:$0xff]
    %v104 = vld [vmem:[%s2 + $0x30] sm:$0xff]
    %v105 = vld [vmem:[%s2 + $0x38] sm:$0xff]
    %v106 = vld [vmem:[%s2 + $0x40] sm:$0xff]
    %v107 = vld [vmem:[%s2 + $0x89] sm:$0x1]
    %v108 = vlaneseq
    %v109 = vshrl.u32 %v108, 7
    %v110 = vsub.s32 0, %v109
    %v111 = vrot.slane %v107, %v110
    %vm112 = vcmask 523264
    %v114 = vsel %vm112, %v95, 0
    %v117 = vsel %vm112, %v96, 0
    %v120 = vsel %vm112, %v97, 0
    %v123 = vsel %vm112, %v98, 0
    %125 = vmatprep.subr.mxu0 0.0
    %126 = vmatpush1.msra.mxu0 0.0
    %127 = vmatprep.subr.mxu0 0.0
    %128 = vmatpush1.msra.mxu0 0.0
    %129 = vmatprep.subr.mxu0 0.0
    %130 = vmatpush1.msra.mxu0 0.0
    %131 = vmatprep.subr.mxu0 0.0
    %132 = vmatpush1.msra.mxu0 0.0
    %133 = vmatprep.subr.mxu0 0.0
    %134 = vmatpush1.msra.mxu0 0.0
    %135 = vmatprep.subr.mxu0 0.0
    %136 = vmatpush1.msra.mxu0 0.0
    %137 = vmatprep.subr.mxu0 0.0
    %138 = vmatpush1.msra.mxu0 0.0
    %139 = vmatprep.subr.mxu0 0.0
    %140 = vmatpush1.msra.mxu0 0.0
    %141 = vmatprep.subr.mxu0 0.0
    %142 = vmatpush1.msra.mxu0 %v106
    %143 = vmatprep.subr.mxu0 0.0
    %144 = vmatpush1.msra.mxu0 %v105
    %145 = vmatprep.subr.mxu0 0.0
    %146 = vmatpush1.msra.mxu0 %v104
    %147 = vmatprep.subr.mxu0 0.0
    %148 = vmatpush1.msra.mxu0 %v103
    %149 = vmatprep.subr.mxu0 0.0
    %150 = vmatpush1.msra.mxu0 %v102
    %151 = vmatprep.subr.mxu0 0.0
    %152 = vmatpush1.msra.mxu0 %v101
    %153 = vmatprep.subr.mxu0 0.0
    %154 = vmatpush1.msra.mxu0 %v100
    %155 = vmatprep.subr.mxu0 0.0
    %156 = vmatpush1.msra.mxu0 %v99
    %157 = vmatprep.subr.mxu0 0.0
    %158 = vmatpush2.msra.mxu0 0.0
    %159 = vmatprep.subr.mxu0 0.0
    %160 = vmatpush2.msra.mxu0 0.0
    %161 = vmatprep.subr.mxu0 0.0
    %162 = vmatpush2.msra.mxu0 0.0
    %163 = vmatprep.subr.mxu0 0.0
    %164 = vmatpush2.msra.mxu0 0.0
    %165 = vmatprep.subr.mxu0 0.0
    %166 = vmatpush2.msra.mxu0 0.0
    %167 = vmatprep.subr.mxu0 0.0
    %168 = vmatpush2.msra.mxu0 0.0
    %169 = vmatprep.subr.mxu0 0.0
    %170 = vmatpush2.msra.mxu0 0.0
    %171 = vmatprep.subr.mxu0 0.0
    %172 = vmatpush2.msra.mxu0 0.0
    %173 = vmatprep.subr.mxu0 0.0
    %174 = vmatpush2.msra.mxu0 0.0
    %175 = vmatprep.subr.mxu0 0.0
    %176 = vmatpush2.msra.mxu0 0.0
    %177 = vmatprep.subr.mxu0 0.0
    %178 = vmatpush2.msra.mxu0 0.0
    %179 = vmatprep.subr.mxu0 0.0
    %180 = vmatpush2.msra.mxu0 0.0
    %181 = vmatprep.subr.mxu0 0.0
    %182 = vmatpush2.msra.mxu0 0.0
    %183 = vmatprep.subr.mxu0 0.0
    %184 = vmatpush2.msra.mxu0 0.0
    %185 = vmatprep.subr.mxu0 0.0
    %186 = vmatpush2.msra.mxu0 0.0
    %187 = vmatprep.subr.mxu0 0.0
    %188 = vmatpush2.msra.mxu0 0.0
    %189 = vmatprep.mubr.f32.mxu0 0.0
    %190 = vmatmul.mubr.f32.gmra.mxu0 %v114
    %v191 = vpop.f32.mrf.mxu0
    %v192 = vadd.f32 %v111, %v191
    %v193 = vpop.f32.mrf.mxu0
    %194 = vmatprep.mubr.f32.mxu0 0.0
    %195 = vmatmul.mubr.f32.gmra.mxu0 %v117
    %v196 = vpop.f32.mrf.mxu0
    %v197 = vadd.f32 %v111, %v196
    %v198 = vpop.f32.mrf.mxu0
    %199 = vmatprep.mubr.f32.mxu0 0.0
    %200 = vmatmul.mubr.f32.gmra.mxu0 %v120
    %v201 = vpop.f32.mrf.mxu0
    %v202 = vadd.f32 %v111, %v201
    %v203 = vpop.f32.mrf.mxu0
    %204 = vmatprep.mubr.f32.mxu0 0.0
    %205 = vmatmul.mubr.f32.gmra.mxu0 %v123
    %v206 = vpop.f32.mrf.mxu0
    %v207 = vadd.f32 %v111, %v206
    %v208 = vpop.f32.mrf.mxu0
    %209 = vdwg.mxu0
    %v210 = vmax.f32 %v192, 0.0
    %v211 = vmax.f32 %v197, 0.0
    %v212 = vmax.f32 %v202, 0.0
    %v213 = vmax.f32 %v207, 0.0
    %v214 = vld [vmem:[%s2 + $0x48] sm:$0xff]
    %v215 = vld [vmem:[%s2 + $0x50] sm:$0xff]
    %v216 = vld [vmem:[%s2 + $0x58] sm:$0xff]
    %v217 = vld [vmem:[%s2 + $0x60] sm:$0xff]
    %v218 = vld [vmem:[%s2 + $0x68] sm:$0xff]
    %v219 = vld [vmem:[%s2 + $0x70] sm:$0xff]
    %v220 = vld [vmem:[%s2 + $0x78] sm:$0xff]
    %v221 = vld [vmem:[%s2 + $0x80] sm:$0xff]
    %v222 = vld [vmem:[%s2 + $0x8a] sm:$0x1]
    %v223 = vlaneseq
    %v224 = vshrl.u32 %v223, 7
    %v225 = vsub.s32 0, %v224
    %v226 = vrot.slane %v222, %v225
    %v228 = vsel %vm112, %v210, 0
    %v231 = vsel %vm112, %v211, 0
    %v234 = vsel %vm112, %v212, 0
    %v237 = vsel %vm112, %v213, 0
    %239 = vmatprep.subr.mxu0 0.0
    %240 = vmatpush1.msra.mxu0 0.0
    %241 = vmatprep.subr.mxu0 0.0
    %242 = vmatpush1.msra.mxu0 0.0
    %243 = vmatprep.subr.mxu0 0.0
    %244 = vmatpush1.msra.mxu0 0.0
    %245 = vmatprep.subr.mxu0 0.0
    %246 = vmatpush1.msra.mxu0 0.0
    %247 = vmatprep.subr.mxu0 0.0
    %248 = vmatpush1.msra.mxu0 0.0
    %249 = vmatprep.subr.mxu0 0.0
    %250 = vmatpush1.msra.mxu0 0.0
    %251 = vmatprep.subr.mxu0 0.0
    %252 = vmatpush1.msra.mxu0 0.0
    %253 = vmatprep.subr.mxu0 0.0
    %254 = vmatpush1.msra.mxu0 0.0
    %255 = vmatprep.subr.mxu0 0.0
    %256 = vmatpush1.msra.mxu0 %v221
    %257 = vmatprep.subr.mxu0 0.0
    %258 = vmatpush1.msra.mxu0 %v220
    %259 = vmatprep.subr.mxu0 0.0
    %260 = vmatpush1.msra.mxu0 %v219
    %261 = vmatprep.subr.mxu0 0.0
    %262 = vmatpush1.msra.mxu0 %v218
    %263 = vmatprep.subr.mxu0 0.0
    %264 = vmatpush1.msra.mxu0 %v217
    %265 = vmatprep.subr.mxu0 0.0
    %266 = vmatpush1.msra.mxu0 %v216
    %267 = vmatprep.subr.mxu0 0.0
    %268 = vmatpush1.msra.mxu0 %v215
    %269 = vmatprep.subr.mxu0 0.0
    %270 = vmatpush1.msra.mxu0 %v214
    %271 = vmatprep.subr.mxu0 0.0
    %272 = vmatpush2.msra.mxu0 0.0
    %273 = vmatprep.subr.mxu0 0.0
    %274 = vmatpush2.msra.mxu0 0.0
    %275 = vmatprep.subr.mxu0 0.0
    %276 = vmatpush2.msra.mxu0 0.0
    %277 = vmatprep.subr.mxu0 0.0
    %278 = vmatpush2.msra.mxu0 0.0
    %279 = vmatprep.subr.mxu0 0.0
    %280 = vmatpush2.msra.mxu0 0.0
    %281 = vmatprep.subr.mxu0 0.0
    %282 = vmatpush2.msra.mxu0 0.0
    %283 = vmatprep.subr.mxu0 0.0
    %284 = vmatpush2.msra.mxu0 0.0
    %285 = vmatprep.subr.mxu0 0.0
    %286 = vmatpush2.msra.mxu0 0.0
    %287 = vmatprep.subr.mxu0 0.0
    %288 = vmatpush2.msra.mxu0 0.0
    %289 = vmatprep.subr.mxu0 0.0
    %290 = vmatpush2.msra.mxu0 0.0
    %291 = vmatprep.subr.mxu0 0.0
    %292 = vmatpush2.msra.mxu0 0.0
    %293 = vmatprep.subr.mxu0 0.0
    %294 = vmatpush2.msra.mxu0 0.0
    %295 = vmatprep.subr.mxu0 0.0
    %296 = vmatpush2.msra.mxu0 0.0
    %297 = vmatprep.subr.mxu0 0.0
    %298 = vmatpush2.msra.mxu0 0.0
    %299 = vmatprep.subr.mxu0 0.0
    %300 = vmatpush2.msra.mxu0 0.0
    %301 = vmatprep.subr.mxu0 0.0
    %302 = vmatpush2.msra.mxu0 0.0
    %303 = vmatprep.mubr.f32.mxu0 0.0
    %304 = vmatmul.mubr.f32.gmra.mxu0 %v228
    %v305 = vpop.f32.mrf.mxu0
    %v306 = vadd.f32 %v226, %v305
    %v307 = vpop.f32.mrf.mxu0
    %308 = vmatprep.mubr.f32.mxu0 0.0
    %309 = vmatmul.mubr.f32.gmra.mxu0 %v231
    %v310 = vpop.f32.mrf.mxu0
    %v311 = vadd.f32 %v226, %v310
    %v312 = vpop.f32.mrf.mxu0
    %313 = vmatprep.mubr.f32.mxu0 0.0
    %314 = vmatmul.mubr.f32.gmra.mxu0 %v234
    %v315 = vpop.f32.mrf.mxu0
    %v316 = vadd.f32 %v226, %v315
    %v317 = vpop.f32.mrf.mxu0
    %318 = vmatprep.mubr.f32.mxu0 0.0
    %319 = vmatmul.mubr.f32.gmra.mxu0 %v237
    %v320 = vpop.f32.mrf.mxu0
    %v321 = vadd.f32 %v226, %v320
    %v322 = vpop.f32.mrf.mxu0
    %323 = vdwg.mxu0
    %v324 = vsel %vm112, %v306, 0.0
    %v325 = vrot.slane %v324, 4
    %v326 = vadd.f32 %v324, %v325
    %v327 = vrot.slane %v326, 2
    %v328 = vadd.f32 %v326, %v327
    %v329 = vrot.slane %v328, 1
    %v330 = vadd.f32 %v328, %v329
    %v331 = vsel %vm112, %v311, 0.0
    %v332 = vrot.slane %v331, 4
    %v333 = vadd.f32 %v331, %v332
    %v334 = vrot.slane %v333, 2
    %v335 = vadd.f32 %v333, %v334
    %v336 = vrot.slane %v335, 1
    %v337 = vadd.f32 %v335, %v336
    %v338 = vsel %vm112, %v316, 0.0
    %v339 = vrot.slane %v338, 4
    %v340 = vadd.f32 %v338, %v339
    %v341 = vrot.slane %v340, 2
    %v342 = vadd.f32 %v340, %v341
    %v343 = vrot.slane %v342, 1
    %v344 = vadd.f32 %v342, %v343
    %v345 = vsel %vm112, %v321, 0.0
    %v346 = vrot.slane %v345, 4
    %v347 = vadd.f32 %v345, %v346
    %v348 = vrot.slane %v347, 2
    %v349 = vadd.f32 %v347, %v348
    %v350 = vrot.slane %v349, 1
    %v351 = vadd.f32 %v349, %v350
    %v352 = vrcp.pop 8.0
    %v353 = vmul.f32 %v330, %v352
    %v354 = vmul.f32 %v337, %v352
    %v355 = vmul.f32 %v344, %v352
    %v356 = vmul.f32 %v351, %v352
    %v357 = vld [vmem:[%s3] sm:$0xff]
    %v358 = vld [vmem:[%s3 + $0x8] sm:$0xff]
    %v359 = vld [vmem:[%s3 + $0x10] sm:$0xff]
    %v360 = vld [vmem:[%s3 + $0x18] sm:$0xff]
    %v361 = vld [vmem:[%s3 + $0x20] sm:$0xff]
    %v362 = vld [vmem:[%s3 + $0x28] sm:$0xff]
    %v363 = vld [vmem:[%s3 + $0x30] sm:$0xff]
    %v364 = vld [vmem:[%s3 + $0x38] sm:$0xff]
    %v365 = vld [vmem:[%s3 + $0x40] sm:$0xff]
    %v366 = vld [vmem:[%s3 + $0x48] sm:$0xff]
    %v367 = vld [vmem:[%s3 + $0x50] sm:$0xff]
    %v368 = vld [vmem:[%s3 + $0x58] sm:$0xff]
    %v369 = vld [vmem:[%s3 + $0x60] sm:$0xff]
    %v370 = vld [vmem:[%s3 + $0x68] sm:$0xff]
    %v371 = vld [vmem:[%s3 + $0x70] sm:$0xff]
    %v372 = vld [vmem:[%s3 + $0x78] sm:$0xff]
    %s373 = scalar_lea.vmem %s3, 129
    %v374 = vld [vmem:[%s373] ss:$8 sm:$0x3]
    %v376 = vlaneseq
    %v377 = vshrl.u32 %v376, 7
    %v378 = vsub.s32 0, %v377
    %v379 = vrot.slane %v374, %v378
    %v380 = vlaneseq
    %v381 = vshrl.u32 %v380, 7
    %v382 = vsub.s32 1, %v381
    %v383 = vrot.slane %v374, %v382
    %vm390 = vcmask 1041409
    %v391 = vsel %vm390, %v354, %v353
    %vm392 = vcmask 1042434
    %v393 = vsel %vm392, %v355, %v391
    %vm394 = vcmask 1043459
    %v395 = vsel %vm394, %v356, %v393
    %v396 = vsel %vm112, %v395, 0
    %398 = vmatprep.subr.mxu0 0.0
    %399 = vmatpush1.msra.mxu0 0.0
    %400 = vmatprep.subr.mxu0 0.0
    %401 = vmatpush1.msra.mxu0 0.0
    %402 = vmatprep.subr.mxu0 0.0
    %403 = vmatpush1.msra.mxu0 0.0
    %404 = vmatprep.subr.mxu0 0.0
    %405 = vmatpush1.msra.mxu0 0.0
    %406 = vmatprep.subr.mxu0 0.0
    %407 = vmatpush1.msra.mxu0 0.0
    %408 = vmatprep.subr.mxu0 0.0
    %409 = vmatpush1.msra.mxu0 0.0
    %410 = vmatprep.subr.mxu0 0.0
    %411 = vmatpush1.msra.mxu0 0.0
    %412 = vmatprep.subr.mxu0 0.0
    %413 = vmatpush1.msra.mxu0 0.0
    %414 = vmatprep.subr.mxu0 %v372
    %415 = vmatpush1.msra.mxu0 %v371
    %416 = vmatprep.subr.mxu0 %v370
    %417 = vmatpush1.msra.mxu0 %v369
    %418 = vmatprep.subr.mxu0 %v368
    %419 = vmatpush1.msra.mxu0 %v367
    %420 = vmatprep.subr.mxu0 %v366
    %421 = vmatpush1.msra.mxu0 %v365
    %422 = vmatprep.subr.mxu0 %v364
    %423 = vmatpush1.msra.mxu0 %v363
    %424 = vmatprep.subr.mxu0 %v362
    %425 = vmatpush1.msra.mxu0 %v361
    %426 = vmatprep.subr.mxu0 %v360
    %427 = vmatpush1.msra.mxu0 %v359
    %428 = vmatprep.subr.mxu0 %v358
    %429 = vmatpush1.msra.mxu0 %v357
    %430 = vmatprep.subr.mxu0 0.0
    %431 = vmatpush2.msra.mxu0 0.0
    %432 = vmatprep.subr.mxu0 0.0
    %433 = vmatpush2.msra.mxu0 0.0
    %434 = vmatprep.subr.mxu0 0.0
    %435 = vmatpush2.msra.mxu0 0.0
    %436 = vmatprep.subr.mxu0 0.0
    %437 = vmatpush2.msra.mxu0 0.0
    %438 = vmatprep.subr.mxu0 0.0
    %439 = vmatpush2.msra.mxu0 0.0
    %440 = vmatprep.subr.mxu0 0.0
    %441 = vmatpush2.msra.mxu0 0.0
    %442 = vmatprep.subr.mxu0 0.0
    %443 = vmatpush2.msra.mxu0 0.0
    %444 = vmatprep.subr.mxu0 0.0
    %445 = vmatpush2.msra.mxu0 0.0
    %446 = vmatprep.subr.mxu0 0.0
    %447 = vmatpush2.msra.mxu0 0.0
    %448 = vmatprep.subr.mxu0 0.0
    %449 = vmatpush2.msra.mxu0 0.0
    %450 = vmatprep.subr.mxu0 0.0
    %451 = vmatpush2.msra.mxu0 0.0
    %452 = vmatprep.subr.mxu0 0.0
    %453 = vmatpush2.msra.mxu0 0.0
    %454 = vmatprep.subr.mxu0 0.0
    %455 = vmatpush2.msra.mxu0 0.0
    %456 = vmatprep.subr.mxu0 0.0
    %457 = vmatpush2.msra.mxu0 0.0
    %458 = vmatprep.subr.mxu0 0.0
    %459 = vmatpush2.msra.mxu0 0.0
    %460 = vmatprep.subr.mxu0 0.0
    %461 = vmatpush2.msra.mxu0 0.0
    %462 = vmatprep.mubr.f32.mxu0 0.0
    %463 = vmatmul.mubr.f32.gmra.mxu0 %v396
    %v464 = vpop.f32.mrf.mxu0
    %v465 = vadd.f32 %v379, %v464
    %v466 = vpop.f32.mrf.mxu0
    %v467 = vadd.f32 %v383, %v466
    %468 = vdwg.mxu0
    %vm469 = vcmask 27648
    %v470 = vsel %vm469, %v467, -inf
    %471 = vmax.xlane.f32.xlu0 %v470
    %v472 = vpop.xlane.xlu0 %471
    %v473 = vsub.f32 %v467, %v472
    %v474 = vmul.f32 %v473, 1.442695
    %v475 = vpow.pop %v474
    %v476 = vsel %vm469, %v475, 0.0
    %477 = vadd.xlane.f32.xlu0 %v476
    %v478 = vpop.xlane.xlu0 %477
    %v479 = vrcp.pop %v478
    %v480 = vmul.f32 %v475, %v479
    %v483 = vunpack.c.l.s4 1966171168
    %v484 = vunpack.c.0.s8 %v483
    %v485 = vlaneseq
    %v486 = vshrl.u32 %v485, 7
    %v487 = vsub.s32 %v484, %v486
    %v488 = vrot.slane %v480, %v487
    %v489 = vcombine.high %v488, %v488
    %v491 = vunpack.c.l.s4 1966171168
    %v492 = vunpack.c.0.s8 %v491
    %v493 = vlaneseq
    %v494 = vshrl.u32 %v493, 7
    %v495 = vsub.s32 %v492, %v494
    %v496 = vrot.slane %v488, %v495
    %v498 = vunpack.c.l.s4 1966171168
    %v499 = vunpack.c.0.s8 %v498
    %v500 = vlaneseq
    %v501 = vshrl.u32 %v500, 7
    %v502 = vsub.s32 %v499, %v501
    %v503 = vrot.slane %v489, %v502
    %v504 = vcombine.high %v496, %v496
    %v505 = vcombine.high %v503, %v503
    %vm510 = vcmask 24576
    %511 = vst.msk [vmem:[#allocation4] sm:$0x1] %vm510, %v496
    %512 = vst.msk [vmem:[#allocation4 + $0x1] sm:$0x1] %vm510, %v503
    %513 = vst.msk [vmem:[#allocation4 + $0x2] sm:$0x1] %vm510, %v504
    %514 = vst.msk [vmem:[#allocation4 + $0x3] sm:$0x1] %vm510, %v505
    %v515 = vld [vmem:[%s1] sm:$0xff]
    %v516 = vld [vmem:[%s1 + $0x8] sm:$0xff]
    %v517 = vld [vmem:[%s1 + $0x10] sm:$0xff]
    %v518 = vld [vmem:[%s1 + $0x18] sm:$0xff]
    %v519 = vld [vmem:[%s3 + $0x80] ss:$0 sm:$0xff]
    %521 = vset.pattern.permute.xlu0 0
    %522 = vperm.xlu0 %521, %v515
    %v523 = vpop.permute.xlu0 %522
    %526 = vset.pattern.permute.xlu0 0
    %527 = vperm.xlu0 %526, %v516
    %v528 = vpop.permute.xlu0 %527
    %531 = vset.pattern.permute.xlu0 0
    %532 = vperm.xlu0 %531, %v517
    %v533 = vpop.permute.xlu0 %532
    %536 = vset.pattern.permute.xlu0 0
    %537 = vperm.xlu0 %536, %v518
    %v538 = vpop.permute.xlu0 %537
    %v540 = vmul.f32 %v523, %v519
    %v541 = vmul.f32 %v528, %v519
    %v542 = vmul.f32 %v533, %v519
    %v543 = vmul.f32 %v538, %v519
    %v546 = vunpack.c.l.s4 1966171168
    %v547 = vunpack.c.0.s8 %v546
    %v548 = vlaneseq
    %v549 = vshrl.u32 %v548, 7
    %v550 = vsub.s32 %v547, %v549
    %v551 = vrot.slane %v465, %v550
    %v552 = vcombine.high %v551, %v551
    %v554 = vunpack.c.l.s4 1966171168
    %v555 = vunpack.c.0.s8 %v554
    %v556 = vlaneseq
    %v557 = vshrl.u32 %v556, 7
    %v558 = vsub.s32 %v555, %v557
    %v559 = vrot.slane %v551, %v558
    %v561 = vunpack.c.l.s4 1966171168
    %v562 = vunpack.c.0.s8 %v561
    %v563 = vlaneseq
    %v564 = vshrl.u32 %v563, 7
    %v565 = vsub.s32 %v562, %v564
    %v566 = vrot.slane %v552, %v565
    %v567 = vcombine.high %v559, %v559
    %v568 = vcombine.high %v566, %v566
    %v569 = vlaneseq
    %v570 = vshrl.u32 %v569, 7
    %v571 = vsub.s32 0, %v570
    %v572 = vrot.slane %v559, %v571
    %v573 = vlaneseq
    %v574 = vshrl.u32 %v573, 7
    %v575 = vsub.s32 0, %v574
    %v576 = vrot.slane %v566, %v575
    %v577 = vlaneseq
    %v578 = vshrl.u32 %v577, 7
    %v579 = vsub.s32 0, %v578
    %v580 = vrot.slane %v567, %v579
    %v581 = vlaneseq
    %v582 = vshrl.u32 %v581, 7
    %v583 = vsub.s32 0, %v582
    %v584 = vrot.slane %v568, %v583
    %v589 = vadd.f32 %v572, %v540
    %v590 = vadd.f32 %v576, %v541
    %v591 = vadd.f32 %v580, %v542
    %v592 = vadd.f32 %v584, %v543
    %v593 = vmax.f32 %v589, 0.0
    %v594 = vmax.f32 %v590, 0.0
    %v595 = vmax.f32 %v591, 0.0
    %v596 = vmax.f32 %v592, 0.0
    %v597 = vld [vmem:[%s4] sm:$0xff]
    %v598 = vld [vmem:[%s4 + $0x8] sm:$0xff]
    %v599 = vld [vmem:[%s4 + $0x10] sm:$0xff]
    %v600 = vld [vmem:[%s4 + $0x18] sm:$0xff]
    %v601 = vld [vmem:[%s4 + $0x20] sm:$0xff]
    %v602 = vld [vmem:[%s4 + $0x28] sm:$0xff]
    %v603 = vld [vmem:[%s4 + $0x30] sm:$0xff]
    %v604 = vld [vmem:[%s4 + $0x38] sm:$0xff]
    %v605 = vld [vmem:[%s4 + $0x40] sm:$0xff]
    %v606 = vld [vmem:[%s4 + $0x48] sm:$0xff]
    %v607 = vld [vmem:[%s4 + $0x50] sm:$0xff]
    %v608 = vld [vmem:[%s4 + $0x58] sm:$0xff]
    %v609 = vld [vmem:[%s4 + $0x60] sm:$0xff]
    %v610 = vld [vmem:[%s4 + $0x68] sm:$0xff]
    %v611 = vld [vmem:[%s4 + $0x70] sm:$0xff]
    %v612 = vld [vmem:[%s4 + $0x78] sm:$0xff]
    %v613 = vld [vmem:[%s4 + $0x80] sm:$0x1]
    %v614 = vlaneseq
    %v615 = vshrl.u32 %v614, 7
    %v616 = vsub.s32 0, %v615
    %v617 = vrot.slane %v613, %v616
    %618 = vmatprep.subr.mxu0 0.0
    %619 = vmatpush1.msra.mxu0 %v612
    %620 = vmatprep.subr.mxu0 0.0
    %621 = vmatpush1.msra.mxu0 %v611
    %622 = vmatprep.subr.mxu0 0.0
    %623 = vmatpush1.msra.mxu0 %v610
    %624 = vmatprep.subr.mxu0 0.0
    %625 = vmatpush1.msra.mxu0 %v609
    %626 = vmatprep.subr.mxu0 0.0
    %627 = vmatpush1.msra.mxu0 %v608
    %628 = vmatprep.subr.mxu0 0.0
    %629 = vmatpush1.msra.mxu0 %v607
    %630 = vmatprep.subr.mxu0 0.0
    %631 = vmatpush1.msra.mxu0 %v606
    %632 = vmatprep.subr.mxu0 0.0
    %633 = vmatpush1.msra.mxu0 %v605
    %634 = vmatprep.subr.mxu0 0.0
    %635 = vmatpush1.msra.mxu0 %v604
    %636 = vmatprep.subr.mxu0 0.0
    %637 = vmatpush1.msra.mxu0 %v603
    %638 = vmatprep.subr.mxu0 0.0
    %639 = vmatpush1.msra.mxu0 %v602
    %640 = vmatprep.subr.mxu0 0.0
    %641 = vmatpush1.msra.mxu0 %v601
    %642 = vmatprep.subr.mxu0 0.0
    %643 = vmatpush1.msra.mxu0 %v600
    %644 = vmatprep.subr.mxu0 0.0
    %645 = vmatpush1.msra.mxu0 %v599
    %646 = vmatprep.subr.mxu0 0.0
    %647 = vmatpush1.msra.mxu0 %v598
    %648 = vmatprep.subr.mxu0 0.0
    %649 = vmatpush1.msra.mxu0 %v597
    %650 = vmatprep.subr.mxu0 0.0
    %651 = vmatpush2.msra.mxu0 0.0
    %652 = vmatprep.subr.mxu0 0.0
    %653 = vmatpush2.msra.mxu0 0.0
    %654 = vmatprep.subr.mxu0 0.0
    %655 = vmatpush2.msra.mxu0 0.0
    %656 = vmatprep.subr.mxu0 0.0
    %657 = vmatpush2.msra.mxu0 0.0
    %658 = vmatprep.subr.mxu0 0.0
    %659 = vmatpush2.msra.mxu0 0.0
    %660 = vmatprep.subr.mxu0 0.0
    %661 = vmatpush2.msra.mxu0 0.0
    %662 = vmatprep.subr.mxu0 0.0
    %663 = vmatpush2.msra.mxu0 0.0
    %664 = vmatprep.subr.mxu0 0.0
    %665 = vmatpush2.msra.mxu0 0.0
    %666 = vmatprep.subr.mxu0 0.0
    %667 = vmatpush2.msra.mxu0 0.0
    %668 = vmatprep.subr.mxu0 0.0
    %669 = vmatpush2.msra.mxu0 0.0
    %670 = vmatprep.subr.mxu0 0.0
    %671 = vmatpush2.msra.mxu0 0.0
    %672 = vmatprep.subr.mxu0 0.0
    %673 = vmatpush2.msra.mxu0 0.0
    %674 = vmatprep.subr.mxu0 0.0
    %675 = vmatpush2.msra.mxu0 0.0
    %676 = vmatprep.subr.mxu0 0.0
    %677 = vmatpush2.msra.mxu0 0.0
    %678 = vmatprep.subr.mxu0 0.0
    %679 = vmatpush2.msra.mxu0 0.0
    %680 = vmatprep.subr.mxu0 0.0
    %681 = vmatpush2.msra.mxu0 0.0
    %682 = vmatprep.mubr.f32.mxu0 0.0
    %683 = vmatmul.mubr.f32.gmra.mxu0 %v593
    %v684 = vpop.f32.mrf.mxu0
    %v685 = vadd.f32 %v617, %v684
    %v686 = vpop.f32.mrf.mxu0
    %687 = vmatprep.mubr.f32.mxu0 0.0
    %688 = vmatmul.mubr.f32.gmra.mxu0 %v594
    %v689 = vpop.f32.mrf.mxu0
    %v690 = vadd.f32 %v617, %v689
    %v691 = vpop.f32.mrf.mxu0
    %692 = vmatprep.mubr.f32.mxu0 0.0
    %693 = vmatmul.mubr.f32.gmra.mxu0 %v595
    %v694 = vpop.f32.mrf.mxu0
    %v695 = vadd.f32 %v617, %v694
    %v696 = vpop.f32.mrf.mxu0
    %697 = vmatprep.mubr.f32.mxu0 0.0
    %698 = vmatmul.mubr.f32.gmra.mxu0 %v596
    %v699 = vpop.f32.mrf.mxu0
    %v700 = vadd.f32 %v617, %v699
    %v701 = vpop.f32.mrf.mxu0
    %702 = vdwg.mxu0
    %vm703 = vcmask 64512
    %704 = vst.msk [vmem:[#allocation2] sm:$0xff] %vm703, %v685
    %705 = vst.msk [vmem:[#allocation2 + $0x8] sm:$0xff] %vm703, %v690
    %706 = vst.msk [vmem:[#allocation2 + $0x10] sm:$0xff] %vm703, %v695
    %707 = vst.msk [vmem:[#allocation2 + $0x18] sm:$0xff] %vm703, %v700
    // Predicated region
    $region22: #{tpu_custom_call.1} parent=1 // pred_check
      _
    $region23: #{tpu_custom_call.1} parent=1 // pred_check_branch
      %709 = sbr.rel (0) target = $region25
    $region24: #{tpu_custom_call.1} parent=1 // pred_region
      %s711 = ssub.s32 512, 512
      %712 = vsyncadd [#allocation3], %s711
      %s713 = sshll.u32 [#allocation2], 4
      %s714 = int_to_ptr.vmem [resolvable:$true] %s713
      %719 = dma.vmem_to_hbm [thread:$0]  %s714, 512, %s5, [#allocation3], 128, 128, 8
    $region25: #{tpu_custom_call.1} parent=1 // pred_fallthru
      _
    // Predicated region
    $region26: #{tpu_custom_call.1} parent=1 // pred_check
      _
    $region27: #{tpu_custom_call.1} parent=1 // pred_check_branch
      %721 = sbr.rel (0) target = $region29
    $region28: #{tpu_custom_call.1} parent=1 // pred_region
      %s723 = ssub.s32 64, 64
      %724 = vsyncadd [#allocation5], %s723
      %s725 = sshll.u32 [#allocation4], 4
      %s726 = int_to_ptr.vmem [resolvable:$true] %s725
      %731 = dma.vmem_to_hbm [thread:$0]  %s726, 64, %s6, [#allocation5], 16, 16, 1
    $region29: #{tpu_custom_call.1} parent=1 // pred_fallthru
      _
    // Predicated region
    $region30: #{tpu_custom_call.1} parent=1 // pred_check
      _
    $region31: #{tpu_custom_call.1} parent=1 // pred_check_branch
      %733 = sbr.rel (0) target = $region33
    $region32: #{tpu_custom_call.1} parent=1 // pred_region
      %734 = dma.done [#allocation3], 512
    $region33: #{tpu_custom_call.1} parent=1 // pred_fallthru
      _
    // Predicated region
    $region34: #{tpu_custom_call.1} parent=1 // pred_check
      _
    $region35: #{tpu_custom_call.1} parent=1 // pred_check_branch
      %736 = sbr.rel (0) target = $region37
    $region36: #{tpu_custom_call.1} parent=1 // pred_region
      %737 = dma.done [#allocation5], 64
    $region37: #{tpu_custom_call.1} parent=1 // pred_fallthru
      _
    %738 = vsyncpa [#allocation3], 1
    %739 = vsyncpa [#allocation5], 1

</llo_original>
